<compile_context>
chip_gen: v7x
topology: tpu7x:2x2x1
jax: 0.10.0
libtpu: 0.0.40
codegen_flags: <defaults>
</compile_context>

<pallas_src>
import functools

import jax
import jax.numpy as jnp
from jax.experimental import pallas as pl
from jax.experimental.pallas import tpu as pltpu


def _round_up(n: int, m: int) -> int:
    return ((n + m - 1) // m) * m


def toy_mlp_kernel(xT_ref, w1_ref, b1_ref, w2_ref, b2_ref, oT_ref):
    # xT_ref: [10, TB]  (features x batch-tile, batch on the lane axis)
    # w1_ref: [10, 10]  (PyTorch [out, in] layout, used directly)
    # b1_ref: [10, 1]   (broadcasts over the batch/lane axis)
    # w2_ref: [5, 10]
    # b2_ref: [5, 1]
    # oT_ref: [5, TB]
    h = jnp.dot(w1_ref[...], xT_ref[...], preferred_element_type=jnp.float32)
    h = jnp.maximum(h + b1_ref[...], 0.0)              # bias + ReLU on the VPU
    y = jnp.dot(w2_ref[...], h, preferred_element_type=jnp.float32)
    oT_ref[...] = (y + b2_ref[...]).astype(oT_ref.dtype)


def toy_mp_model_feature_major(xT, w1, b1, w2, b2, *, tb: int = 32768):
    """Feature-major forward: xT [10, B] -> [5, B]. No host-side relayouts."""
    F, B = xT.shape
    assert F == 10 and w1.shape == (10, 10) and w2.shape == (5, 10)

    # Batch tile: user value rounded DOWN to a multiple of 128 (lane width),
    # never below 128, never (much) above what B actually needs.
    tb = max(128, (int(tb) // 128) * 128)
    tile_b = min(tb, _round_up(B, 128))
    n_steps = pl.cdiv(B, tile_b)
    if n_steps > 1:
        # Balance block sizes across steps (also keeps both v7x TCs busy).
        tile_b = min(tile_b, _round_up(pl.cdiv(B, n_steps), 128))
        n_steps = pl.cdiv(B, tile_b)

    # VMEM estimate: double-buffered x (10->16 sublanes) and out (5->8 sublanes)
    # blocks plus f32 intermediates; floor at 16 MiB, cap at 48 MiB (v7x-safe).
    est_vmem = 4 * tile_b * (2 * 16 + 2 * 8 + 2 * 16) + (2 << 20)
    vmem_limit = min(max(int(1.5 * est_vmem), 16 << 20), 48 << 20)

    b1_2d = b1.reshape(10, 1).astype(jnp.float32)
    b2_2d = b2.reshape(5, 1).astype(jnp.float32)

    return pl.pallas_call(
        toy_mlp_kernel,
        out_shape=jax.ShapeDtypeStruct((5, B), jnp.float32),
        grid=(n_steps,),
        in_specs=[
            # Streamed: one lane-dense batch tile per grid step (double-buffered;
            # the ragged last block is clipped automatically by Pallas).
            pl.BlockSpec((10, tile_b), lambda i: (0, i)),
            # Resident across the whole grid (constant block index).
            pl.BlockSpec((10, 10), lambda i: (0, 0)),
            pl.BlockSpec((10, 1), lambda i: (0, 0)),
            pl.BlockSpec((5, 10), lambda i: (0, 0)),
            pl.BlockSpec((5, 1), lambda i: (0, 0)),
        ],
        out_specs=pl.BlockSpec((5, tile_b), lambda i: (0, i)),
        compiler_params=pltpu.CompilerParams(
            dimension_semantics=("parallel",),          # megacore on v7x
            vmem_limit_bytes=vmem_limit,
        ),
    )(xT.astype(jnp.float32), w1, b1_2d, w2, b2_2d)


@functools.partial(jax.jit, static_argnames=("tb",))
def toy_mp_model(x, w1, b1, w2, b2, *, tb: int = 32768):
    """PyTorch-interface forward: x [B, 10] -> [B, 5].

    The two transposes below are layout plumbing at the model boundary only;
    callers that can stay feature-major should call toy_mp_model_feature_major
    directly and skip them (saves ~2x input + ~2x output HBM traffic).
    """
    outT = toy_mp_model_feature_major(x.T, w1, b1, w2, b2, tb=tb)
    return outT.T


def init_params(key):
    """Deterministic init matching PyTorch Linear's default bounds."""
    k1, k2, k3, k4 = jax.random.split(key, 4)
    bound = 1.0 / jnp.sqrt(10.0)                        # fan_in = 10 for both layers
    w1 = jax.random.uniform(k1, (10, 10), jnp.float32, -bound, bound)   # [out, in]
    b1 = jax.random.uniform(k2, (10,), jnp.float32, -bound, bound)
    w2 = jax.random.uniform(k3, (5, 10), jnp.float32, -bound, bound)    # [out, in]
    b2 = jax.random.uniform(k4, (5,), jnp.float32, -bound, bound)
    return w1, b1, w2, b2


def _ref(x, w1, b1, w2, b2):
    # Same math as PyTorch ToyMpModel.forward.
    return jnp.maximum(x @ w1.T + b1, 0.0) @ w2.T + b2


if __name__ == "__main__":
    key = jax.random.PRNGKey(0)
    kx, kp = jax.random.split(key)
    w1, b1, w2, b2 = init_params(kp)

    # Small shape consistent with the module (batch=8, features=10).
    x_small = jax.random.normal(kx, (8, 10), dtype=jnp.float32)
    out_small = jax.block_until_ready(toy_mp_model(x_small, w1, b1, w2, b2))
    assert out_small.shape == (8, 5)
    assert jnp.allclose(out_small, _ref(x_small, w1, b1, w2, b2), atol=1e-5, rtol=1e-5)

    # Ragged multi-step grid exercise (tiny tb forces several batch tiles).
    x_big = jax.random.normal(kx, (300, 10), dtype=jnp.float32)
    out_big = jax.block_until_ready(toy_mp_model(x_big, w1, b1, w2, b2, tb=128))
    assert out_big.shape == (300, 5)
    assert jnp.allclose(out_big, _ref(x_big, w1, b1, w2, b2), atol=1e-5, rtol=1e-5)

    print("KERNEL_OK")
</pallas_src>

<mosaic_0001>
module attributes {stable_mosaic.version = 11 : i64} {
  func.func @toy_mlp_kernel(%arg0: i32, %arg1: memref<10x128xf32, #tpu.memory_space<vmem>>, %arg2: memref<10x10xf32, #tpu.memory_space<vmem>>, %arg3: memref<10x1xf32, #tpu.memory_space<vmem>>, %arg4: memref<5x10xf32, #tpu.memory_space<vmem>>, %arg5: memref<5x1xf32, #tpu.memory_space<vmem>>, %arg6: memref<5x128xf32, #tpu.memory_space<vmem>>) attributes {dimension_semantics = [#tpu.dimension_semantics<parallel>], iteration_bounds = array<i64: 1>, scalar_prefetch = 0 : i64, scratch_operands = 0 : i64, tpu.core_type = #tpu.core_type<tc>, window_params = [{transform_indices = @transform_0, window_bounds = array<i64: 10, 128>}, {pipeline_mode = #tpu.pipeline_mode<synchronous>, transform_indices = @transform_1, window_bounds = array<i64: 10, 10>}, {pipeline_mode = #tpu.pipeline_mode<synchronous>, transform_indices = @transform_2, window_bounds = array<i64: 10, 1>}, {pipeline_mode = #tpu.pipeline_mode<synchronous>, transform_indices = @transform_3, window_bounds = array<i64: 5, 10>}, {pipeline_mode = #tpu.pipeline_mode<synchronous>, transform_indices = @transform_4, window_bounds = array<i64: 5, 1>}, {transform_indices = @transform_5, window_bounds = array<i64: 5, 128>}]} {
    %c0 = arith.constant 0 : index
    %c0_0 = arith.constant 0 : index
    %0 = vector.load %arg2[%c0, %c0_0] : memref<10x10xf32, #tpu.memory_space<vmem>>, vector<10x10xf32>
    %c0_1 = arith.constant 0 : index
    %c0_2 = arith.constant 0 : index
    %1 = vector.load %arg1[%c0_1, %c0_2] : memref<10x128xf32, #tpu.memory_space<vmem>>, vector<10x128xf32>
    %cst = arith.constant dense<0.000000e+00> : vector<10x128xf32>
    %2 = tpu.matmul %0, %1, %cst {dimension_numbers = #tpu.dot_dimension_numbers<[1], [0], [0], [1], [0, 0, 1, 1], [], []>} : vector<10x10xf32>, vector<10x128xf32>, vector<10x128xf32> -> vector<10x128xf32>
    %c0_3 = arith.constant 0 : index
    %c0_4 = arith.constant 0 : index
    %3 = vector.load %arg3[%c0_3, %c0_4] : memref<10x1xf32, #tpu.memory_space<vmem>>, vector<10x1xf32>
    %4 = vector.broadcast %3 : vector<10x1xf32> to vector<10x128xf32>
    %5 = arith.addf %2, %4 : vector<10x128xf32>
    %cst_5 = arith.constant 0.000000e+00 : f32
    %6 = vector.broadcast %cst_5 : f32 to vector<10x128xf32>
    %7 = arith.maximumf %5, %6 : vector<10x128xf32>
    %c0_6 = arith.constant 0 : index
    %c0_7 = arith.constant 0 : index
    %8 = vector.load %arg4[%c0_6, %c0_7] : memref<5x10xf32, #tpu.memory_space<vmem>>, vector<5x10xf32>
    %cst_8 = arith.constant dense<0.000000e+00> : vector<5x128xf32>
    %9 = tpu.matmul %8, %7, %cst_8 {dimension_numbers = #tpu.dot_dimension_numbers<[1], [0], [0], [1], [0, 0, 1, 1], [], []>} : vector<5x10xf32>, vector<10x128xf32>, vector<5x128xf32> -> vector<5x128xf32>
    %c0_9 = arith.constant 0 : index
    %c0_10 = arith.constant 0 : index
    %10 = vector.load %arg5[%c0_9, %c0_10] : memref<5x1xf32, #tpu.memory_space<vmem>>, vector<5x1xf32>
    %11 = vector.broadcast %10 : vector<5x1xf32> to vector<5x128xf32>
    %12 = arith.addf %9, %11 : vector<5x128xf32>
    %c0_11 = arith.constant 0 : index
    %c0_12 = arith.constant 0 : index
    %13 = vector.load %arg6[%c0_11, %c0_12] : memref<5x128xf32, #tpu.memory_space<vmem>>, vector<5x128xf32>
    tpu.vector_store %arg6[%c0_11, %c0_12], %12 {strides = array<i32>} : memref<5x128xf32, #tpu.memory_space<vmem>>, vector<5x128xf32>,
    return
  }
  func.func @transform_0(%arg0: i32) -> (i32, i32) {
    %c0_i32 = arith.constant 0 : i32
    %c0_i32_0 = arith.constant 0 : i32
    return %c0_i32, %arg0 : i32, i32
  }
  func.func @transform_1(%arg0: i32) -> (i32, i32) {
    %c0_i32 = arith.constant 0 : i32
    %c0_i32_0 = arith.constant 0 : i32
    %c0_i32_1 = arith.constant 0 : i32
    return %c0_i32, %c0_i32_0 : i32, i32
  }
  func.func @transform_2(%arg0: i32) -> (i32, i32) {
    %c0_i32 = arith.constant 0 : i32
    %c0_i32_0 = arith.constant 0 : i32
    %c0_i32_1 = arith.constant 0 : i32
    return %c0_i32, %c0_i32_0 : i32, i32
  }
  func.func @transform_3(%arg0: i32) -> (i32, i32) {
    %c0_i32 = arith.constant 0 : i32
    %c0_i32_0 = arith.constant 0 : i32
    %c0_i32_1 = arith.constant 0 : i32
    return %c0_i32, %c0_i32_0 : i32, i32
  }
  func.func @transform_4(%arg0: i32) -> (i32, i32) {
    %c0_i32 = arith.constant 0 : i32
    %c0_i32_0 = arith.constant 0 : i32
    %c0_i32_1 = arith.constant 0 : i32
    return %c0_i32, %c0_i32_0 : i32, i32
  }
  func.func @transform_5(%arg0: i32) -> (i32, i32) {
    %c0_i32 = arith.constant 0 : i32
    %c0_i32_0 = arith.constant 0 : i32
    return %c0_i32, %arg0 : i32, i32
  }
}

</mosaic_0001>

<llo_original>
// kernel: toy_mp_model.1
$region0: #{toy_mp_model.1}
  #allocation0 [shape = 'u32[]', space=smem, size = 0x4, offset = 0x4, fixed_abs, tag = 'smem constant byte address 0x4 - core index']
  #allocation1 [shape = 'u32[144,128]{1,0:T(1,128)}', space=vmem, size = 0x12000, scoped, tag = 'internal scratch']
  %s0 = inlined_call_operand.vmem [shape: f32[10,8], index: 0, kind: input, shape index: {}]
  %s1 = inlined_call_operand.vmem [shape: f32[10,10], index: 1, kind: input, shape index: {}]
  %s2 = inlined_call_operand.vmem [shape: f32[10,1], index: 2, kind: input, shape index: {}]
  %s3 = inlined_call_operand.vmem [shape: f32[5,10], index: 3, kind: input, shape index: {}]
  %s4 = inlined_call_operand.vmem [shape: f32[5,1], index: 4, kind: input, shape index: {}]
  %s5 = inlined_call_operand.vmem [shape: f32[5,8], index: 5, kind: output, shape index: {}]
  %s6 = sld [smem:[#allocation0]]
  $region30: #{toy_mp_model.1} parent=0
    _
  %s8 = ssub.s32 1, %s6
  %s9 = scalar_select 0, %s8, %s6
  // Predicated region
  $region2: #{toy_mp_model.1} parent=0 // pred_check
    _
  $region3: #{toy_mp_model.1} parent=0 // pred_check_branch
    %11 = sbr.rel (0) target = $region5
  $region4: #{toy_mp_model.1} parent=0 // pred_region
    _
  $region5: #{toy_mp_model.1} parent=0 // pred_fallthru
    _
  // Predicated region
  $region6: #{toy_mp_model.1} parent=0 // pred_check
    _
  $region7: #{toy_mp_model.1} parent=0 // pred_check_branch
    %13 = sbr.rel (0) target = $region9
  $region8: #{toy_mp_model.1} parent=0 // pred_region
    _
  $region9: #{toy_mp_model.1} parent=0 // pred_fallthru
    _
  // Predicated region
  $region10: #{toy_mp_model.1} parent=0 // pred_check
    _
  $region11: #{toy_mp_model.1} parent=0 // pred_check_branch
    %15 = sbr.rel (0) target = $region13
  $region12: #{toy_mp_model.1} parent=0 // pred_region
    _
  $region13: #{toy_mp_model.1} parent=0 // pred_fallthru
    _
  // Predicated region
  $region14: #{toy_mp_model.1} parent=0 // pred_check
    _
  $region15: #{toy_mp_model.1} parent=0 // pred_check_branch
    %17 = sbr.rel (0) target = $region17
  $region16: #{toy_mp_model.1} parent=0 // pred_region
    _
  $region17: #{toy_mp_model.1} parent=0 // pred_fallthru
    _
  // Predicated region
  $region18: #{toy_mp_model.1} parent=0 // pred_check
    _
  $region19: #{toy_mp_model.1} parent=0 // pred_check_branch
    %19 = sbr.rel (0) target = $region21
  $region20: #{toy_mp_model.1} parent=0 // pred_region
    _
  $region21: #{toy_mp_model.1} parent=0 // pred_fallthru
    _
  %v20 = vld [vmem:[%s1] sm:$0xff]
  %v21 = vld [vmem:[%s1 + $0x8] sm:$0x3]
  %v22 = vld [vmem:[%s0] sm:$0xff]
  %v23 = vld [vmem:[%s0 + $0x8] sm:$0x3]
  %v24 = vld [vmem:[%s2] sm:$0xff]
  %v25 = vld [vmem:[%s2 + $0x8] sm:$0x3]
  %27 = vset.pattern.permute.xlu0 0
  %28 = vperm.xlu0 %27, %v24
  %v29 = vpop.permute.xlu0 %28
  %32 = vset.pattern.permute.xlu0 0
  %33 = vperm.xlu0 %32, %v25
  %v34 = vpop.permute.xlu0 %33
  %vm36 = vcmask 80896
  %v38 = vsel %vm36, %v20, 0
  %v41 = vsel %vm36, %v21, 0
  %vm43 = vcmask 1041408
  %v45 = vsel %vm43, %v23, 0
  %47 = vmatprep.subr.mxu0 0.0
  %48 = vmatpush1.msra.mxu0 %v22
  %49 = vmatprep.subr.mxu0 0.0
  %50 = vmatpush1.msra.mxu0 %v45
  %51 = vmatprep.subr.mxu0 0.0
  %52 = vmatpush1.msra.mxu0 0.0
  %53 = vmatprep.subr.mxu0 0.0
  %54 = vmatpush1.msra.mxu0 0.0
  %55 = vmatprep.subr.mxu0 0.0
  %56 = vmatpush1.msra.mxu0 0.0
  %57 = vmatprep.subr.mxu0 0.0
  %58 = vmatpush1.msra.mxu0 0.0
  %59 = vmatprep.subr.mxu0 0.0
  %60 = vmatpush1.msra.mxu0 0.0
  %61 = vmatprep.subr.mxu0 0.0
  %62 = vmatpush1.msra.mxu0 0.0
  %63 = vmatprep.subr.mxu0 0.0
  %64 = vmatpush1.msra.mxu0 0.0
  %65 = vmatprep.subr.mxu0 0.0
  %66 = vmatpush1.msra.mxu0 0.0
  %67 = vmatprep.subr.mxu0 0.0
  %68 = vmatpush1.msra.mxu0 0.0
  %69 = vmatprep.subr.mxu0 0.0
  %70 = vmatpush1.msra.mxu0 0.0
  %71 = vmatprep.subr.mxu0 0.0
  %72 = vmatpush1.msra.mxu0 0.0
  %73 = vmatprep.subr.mxu0 0.0
  %74 = vmatpush1.msra.mxu0 0.0
  %75 = vmatprep.subr.mxu0 0.0
  %76 = vmatpush1.msra.mxu0 0.0
  %77 = vmatprep.subr.mxu0 0.0
  %78 = vmatpush1.msra.mxu0 0.0
  %79 = vmatprep.subr.mxu0 0.0
  %80 = vmatpush1.msra.mxu0 0.0
  %81 = vmatprep.subr.mxu0 0.0
  %82 = vmatpush1.msra.mxu0 0.0
  %83 = vmatprep.subr.mxu0 0.0
  %84 = vmatpush1.msra.mxu0 0.0
  %85 = vmatprep.subr.mxu0 0.0
  %86 = vmatpush1.msra.mxu0 0.0
  %87 = vmatprep.subr.mxu0 0.0
  %88 = vmatpush1.msra.mxu0 0.0
  %89 = vmatprep.subr.mxu0 0.0
  %90 = vmatpush1.msra.mxu0 0.0
  %91 = vmatprep.subr.mxu0 0.0
  %92 = vmatpush1.msra.mxu0 0.0
  %93 = vmatprep.subr.mxu0 0.0
  %94 = vmatpush1.msra.mxu0 0.0
  %95 = vmatprep.subr.mxu0 0.0
  %96 = vmatpush1.msra.mxu0 0.0
  %97 = vmatprep.subr.mxu0 0.0
  %98 = vmatpush1.msra.mxu0 0.0
  %99 = vmatprep.subr.mxu0 0.0
  %100 = vmatpush1.msra.mxu0 0.0
  %101 = vmatprep.subr.mxu0 0.0
  %102 = vmatpush1.msra.mxu0 0.0
  %103 = vmatprep.subr.mxu0 0.0
  %104 = vmatpush1.msra.mxu0 0.0
  %105 = vmatprep.subr.mxu0 0.0
  %106 = vmatpush1.msra.mxu0 0.0
  %107 = vmatprep.subr.mxu0 0.0
  %108 = vmatpush1.msra.mxu0 0.0
  %109 = vmatprep.subr.mxu0 0.0
  %110 = vmatpush1.msra.mxu0 0.0
  %111 = vmatprep.mubr.f32.mxu0 0.0
  %112 = vmatmul.mubr.f32.gmra.mrb[0].mxu0 %v38
  %v113 = vpop.f32.mrb[0].mxu0
  %v114 = vadd.f32 %v29, %v113
  %v115 = vpop.f32.mrb[0].mxu0
  %116 = vmatprep.mubr.f32.mxu0 0.0
  %117 = vmatmul.mubr.f32.gmra.mrb[0].mxu0 %v41
  %v118 = vpop.f32.mrb[0].mxu0
  %v119 = vadd.f32 %v34, %v118
  %v120 = vpop.f32.mrb[0].mxu0
  %121 = vdwg.mxu0
  %v122 = vmax.f32 %v114, 0.0
  %v123 = vmax.f32 %v119, 0.0
  %v124 = vld [vmem:[%s3] sm:$0x1f]
  %v125 = vld [vmem:[%s4] sm:$0x1f]
  %127 = vset.pattern.permute.xlu0 0
  %128 = vperm.xlu0 %127, %v125
  %v129 = vpop.permute.xlu0 %128
  %v132 = vsel %vm36, %v124, 0
  %v135 = vsel %vm43, %v123, 0
  %137 = vmatprep.subr.mxu0 0.0
  %138 = vmatpush1.msra.mxu0 %v122
  %139 = vmatprep.subr.mxu0 0.0
  %140 = vmatpush1.msra.mxu0 %v135
  %141 = vmatprep.subr.mxu0 0.0
  %142 = vmatpush1.msra.mxu0 0.0
  %143 = vmatprep.subr.mxu0 0.0
  %144 = vmatpush1.msra.mxu0 0.0
  %145 = vmatprep.subr.mxu0 0.0
  %146 = vmatpush1.msra.mxu0 0.0
  %147 = vmatprep.subr.mxu0 0.0
  %148 = vmatpush1.msra.mxu0 0.0
  %149 = vmatprep.subr.mxu0 0.0
  %150 = vmatpush1.msra.mxu0 0.0
  %151 = vmatprep.subr.mxu0 0.0
  %152 = vmatpush1.msra.mxu0 0.0
  %153 = vmatprep.subr.mxu0 0.0
  %154 = vmatpush1.msra.mxu0 0.0
  %155 = vmatprep.subr.mxu0 0.0
  %156 = vmatpush1.msra.mxu0 0.0
  %157 = vmatprep.subr.mxu0 0.0
  %158 = vmatpush1.msra.mxu0 0.0
  %159 = vmatprep.subr.mxu0 0.0
  %160 = vmatpush1.msra.mxu0 0.0
  %161 = vmatprep.subr.mxu0 0.0
  %162 = vmatpush1.msra.mxu0 0.0
  %163 = vmatprep.subr.mxu0 0.0
  %164 = vmatpush1.msra.mxu0 0.0
  %165 = vmatprep.subr.mxu0 0.0
  %166 = vmatpush1.msra.mxu0 0.0
  %167 = vmatprep.subr.mxu0 0.0
  %168 = vmatpush1.msra.mxu0 0.0
  %169 = vmatprep.subr.mxu0 0.0
  %170 = vmatpush1.msra.mxu0 0.0
  %171 = vmatprep.subr.mxu0 0.0
  %172 = vmatpush1.msra.mxu0 0.0
  %173 = vmatprep.subr.mxu0 0.0
  %174 = vmatpush1.msra.mxu0 0.0
  %175 = vmatprep.subr.mxu0 0.0
  %176 = vmatpush1.msra.mxu0 0.0
  %177 = vmatprep.subr.mxu0 0.0
  %178 = vmatpush1.msra.mxu0 0.0
  %179 = vmatprep.subr.mxu0 0.0
  %180 = vmatpush1.msra.mxu0 0.0
  %181 = vmatprep.subr.mxu0 0.0
  %182 = vmatpush1.msra.mxu0 0.0
  %183 = vmatprep.subr.mxu0 0.0
  %184 = vmatpush1.msra.mxu0 0.0
  %185 = vmatprep.subr.mxu0 0.0
  %186 = vmatpush1.msra.mxu0 0.0
  %187 = vmatprep.subr.mxu0 0.0
  %188 = vmatpush1.msra.mxu0 0.0
  %189 = vmatprep.subr.mxu0 0.0
  %190 = vmatpush1.msra.mxu0 0.0
  %191 = vmatprep.subr.mxu0 0.0
  %192 = vmatpush1.msra.mxu0 0.0
  %193 = vmatprep.subr.mxu0 0.0
  %194 = vmatpush1.msra.mxu0 0.0
  %195 = vmatprep.subr.mxu0 0.0
  %196 = vmatpush1.msra.mxu0 0.0
  %197 = vmatprep.subr.mxu0 0.0
  %198 = vmatpush1.msra.mxu0 0.0
  %199 = vmatprep.subr.mxu0 0.0
  %200 = vmatpush1.msra.mxu0 0.0
  %201 = vmatprep.mubr.f32.mxu0 0.0
  %202 = vmatmul.mubr.f32.gmra.mrb[0].mxu0 %v132
  %v203 = vpop.f32.mrb[0].mxu0
  %v204 = vadd.f32 %v129, %v203
  %v205 = vpop.f32.mrb[0].mxu0
  %206 = vdwg.mxu0
  %207 = vst [vmem:[%s5] sm:$0x1f] %v204
  // Predicated region
  $region22: #{toy_mp_model.1} parent=0 // pred_check
    _
  $region23: #{toy_mp_model.1} parent=0 // pred_check_branch
    %209 = sbr.rel (0) target = $region25
  $region24: #{toy_mp_model.1} parent=0 // pred_region
    _
  $region25: #{toy_mp_model.1} parent=0 // pred_fallthru
    _
  // Predicated region
  $region26: #{toy_mp_model.1} parent=0 // pred_check
    _
  $region27: #{toy_mp_model.1} parent=0 // pred_check_branch
    %211 = sbr.rel (0) target = $region29
  $region28: #{toy_mp_model.1} parent=0 // pred_region
    _
  $region29: #{toy_mp_model.1} parent=0 // pred_fallthru
    _

</llo_original>
